<compile_context>
chip_gen: v7x
topology: tpu7x:2x2x1
jax: 0.10.0
libtpu: 0.0.40
codegen_flags: <defaults>
</compile_context>

<pallas_src>
import jax
import jax.numpy as jnp
from jax.experimental import pallas as pl
from jax.experimental.pallas import tpu as pltpu


def _round_up(n, m):
    return ((n + m - 1) // m) * m


def _mlp_kernel(x_ref, w1_ref, b1_ref, w2_ref, b2_ref, o_ref):
    # fc1 on the MXU with f32 accumulation (works for bf16 or f32 x / w1).
    h = jnp.dot(x_ref[...], w1_ref[...], preferred_element_type=jnp.float32)
    h = jnp.maximum(h + b1_ref[...], 0.0)                         # ReLU, [TB, H] f32
    # fc2 (N=1 column) also on the MXU; HBM-bound kernel -> MXU slack is free.
    y = jnp.dot(h, w2_ref[...], preferred_element_type=jnp.float32) + b2_ref[0]
    # Numerically stable softplus: max(y, 0) + log1p(exp(-|y|)).
    sp = jnp.maximum(y, 0.0) + jnp.log1p(jnp.exp(-jnp.abs(y)))    # [TB, 1]
    o_ref[...] = sp.astype(o_ref.dtype)


def downstream_mlp(x, w1, b1, w2, b2, *, tile_b=1024):
    """x:[B, D], w1:[D, H], b1:[H], w2:[H, 1], b2:[1] -> [B, 1] in x.dtype."""
    B, D = x.shape
    H = w1.shape[1]

    # Streamed matmul operands stay in the caller's dtype (bf16 stays bf16);
    # tiny bias / fc2 weights are f32 for the f32 accumulation path.
    w1 = w1.astype(x.dtype)
    b1_row = b1.reshape(1, H).astype(jnp.float32)
    w2_col = w2.reshape(H, 1).astype(jnp.float32)
    b2_s = b2.reshape(1).astype(jnp.float32)
    itemsize = jnp.dtype(x.dtype).itemsize

    # ---- generation-aware VMEM budget & batch-tile selection -----------------
    try:
        vmem_cap = pltpu.get_tpu_info().vmem_capacity_bytes   # 64 MiB v7x, 128 MiB v5e/v6e
    except Exception:
        vmem_cap = 64 * 1024 * 1024                           # conservative (v7x)
    vmem_limit = int(min((vmem_cap * 3) // 4, 100 * 1024 * 1024))

    # Resident weights: single-buffered w1 + tiny b1/w2 blocks.
    weight_bytes = D * H * itemsize + 4 * (2 * H + 8) * 2
    # Per batch row: 2x-buffered x block + f32 (tb, H) hidden activation
    # + 2x-buffered (tb, 1) f32 output + temp slack.
    per_row = 2 * D * itemsize + 4 * H + 2 * 4 + 64
    budget = vmem_limit - weight_bytes - (2 << 20)            # 2 MiB headroom
    rows = max(budget // per_row, 8)

    tb = max(8, min(tile_b, rows))
    if B > 256:
        # keep >= 2 grid steps so v7x's second TensorCore has work
        tb = min(tb, _round_up(pl.cdiv(B, 2), 128))
    tb = min(tb, _round_up(B, 8))                             # don't over-pad tiny batches
    tb = (tb // 128) * 128 if tb >= 128 else _round_up(tb, 8)

    Bp = _round_up(B, tb)
    if Bp != B:
        x = jnp.pad(x, ((0, Bp - B), (0, 0)))                 # zero rows, sliced off below
    num_tiles = Bp // tb

    cost = pl.CostEstimate(
        flops=2 * Bp * D * H + 2 * Bp * H,
        transcendentals=2 * Bp,
        bytes_accessed=itemsize * (Bp * D + D * H) + 4 * (2 * H + 1 + Bp),
    )

    def build(single_buffer_weights):
        wmode = dict(pipeline_mode=pl.Buffered(1)) if single_buffer_weights else {}
        return pl.pallas_call(
            _mlp_kernel,
            out_shape=jax.ShapeDtypeStruct((Bp, 1), x.dtype),
            grid=(num_tiles,),
            in_specs=[
                pl.BlockSpec((tb, D), lambda i: (i, 0)),              # x: streamed
                pl.BlockSpec((D, H), lambda i: (0, 0), **wmode),      # w1: resident
                pl.BlockSpec((1, H), lambda i: (0, 0), **wmode),      # b1: resident
                pl.BlockSpec((H, 1), lambda i: (0, 0), **wmode),      # w2: resident
                pl.BlockSpec(memory_space=pltpu.MemorySpace.SMEM),    # b2 scalar
            ],
            out_specs=pl.BlockSpec((tb, 1), lambda i: (i, 0)),
            compiler_params=pltpu.CompilerParams(
                dimension_semantics=("parallel",),
                vmem_limit_bytes=vmem_limit,
            ),
            cost_estimate=cost,
        )

    try:
        out = build(True)(x, w1, b1_row, w2_col, b2_s)
    except Exception:
        # Fallback if single-buffered constant-index blocks are rejected.
        out = build(False)(x, w1, b1_row, w2_col, b2_s)

    return out[:B]


def _reference(x, w1, b1, w2, b2):
    h = jnp.maximum(x @ w1 + b1, 0.0)
    y = h @ w2 + b2
    return jnp.maximum(y, 0.0) + jnp.log1p(jnp.exp(-jnp.abs(y)))


if __name__ == "__main__":
    # Small, deterministic problem: batch=8, input_dim=32, hidden_dim=32.
    B, D, H = 8, 32, 32
    key = jax.random.PRNGKey(0)
    kx, k1, k2, k3, k4 = jax.random.split(key, 5)

    x = jax.random.normal(kx, (B, D), dtype=jnp.float32)
    # Same shapes nn.Linear would create, stored transposed for right-multiply.
    w1 = jax.random.normal(k1, (D, H), dtype=jnp.float32) * (1.0 / jnp.sqrt(D))
    b1 = jax.random.normal(k2, (H,), dtype=jnp.float32) * 0.1
    w2 = jax.random.normal(k3, (H, 1), dtype=jnp.float32) * (1.0 / jnp.sqrt(H))
    b2 = jax.random.normal(k4, (1,), dtype=jnp.float32) * 0.1

    out = downstream_mlp(x, w1, b1, w2, b2)
    jax.block_until_ready(out)
    ref = _reference(x, w1, b1, w2, b2)
    assert out.shape == (B, 1)
    assert jnp.allclose(out, ref, atol=2e-5, rtol=2e-5)

    # Second check: multi-tile grid + batch padding path (B not a multiple of
    # the tile, several grid steps).
    B2 = 300
    x2 = jax.random.normal(jax.random.PRNGKey(1), (B2, D), dtype=jnp.float32)
    out2 = downstream_mlp(x2, w1, b1, w2, b2, tile_b=128)
    jax.block_until_ready(out2)
    ref2 = _reference(x2, w1, b1, w2, b2)
    assert out2.shape == (B2, 1)
    assert jnp.allclose(out2, ref2, atol=2e-5, rtol=2e-5)

    # Third check: bf16 streaming path (no forced f32 upcast of x / w1).
    xb = x2.astype(jnp.bfloat16)
    out3 = downstream_mlp(xb, w1.astype(jnp.bfloat16), b1, w2, b2)
    jax.block_until_ready(out3)
    ref3 = _reference(xb.astype(jnp.float32), w1, b1, w2, b2)
    assert out3.shape == (B2, 1)
    assert jnp.allclose(out3.astype(jnp.float32), ref3, atol=3e-2, rtol=3e-2)

    print("KERNEL_OK")
</pallas_src>

<mosaic_0001>
module attributes {stable_mosaic.version = 11 : i64} {
  func.func @_mlp_kernel(%arg0: i32, %arg1: memref<8x32xf32, #tpu.memory_space<vmem>>, %arg2: memref<32x32xf32, #tpu.memory_space<vmem>>, %arg3: memref<1x32xf32, #tpu.memory_space<vmem>>, %arg4: memref<32x1xf32, #tpu.memory_space<vmem>>, %arg5: memref<1xf32, #tpu.memory_space<smem>>, %arg6: memref<8x1xf32, #tpu.memory_space<vmem>>) attributes {dimension_semantics = [#tpu.dimension_semantics<parallel>], iteration_bounds = array<i64: 1>, scalar_prefetch = 0 : i64, scratch_operands = 0 : i64, tpu.core_type = #tpu.core_type<tc>, window_params = [{transform_indices = @transform_0, window_bounds = array<i64: 8, 32>}, {pipeline_mode = #tpu.pipeline_mode<synchronous>, transform_indices = @transform_1, window_bounds = array<i64: 32, 32>}, {pipeline_mode = #tpu.pipeline_mode<synchronous>, transform_indices = @transform_2, window_bounds = array<i64: 1, 32>}, {pipeline_mode = #tpu.pipeline_mode<synchronous>, transform_indices = @transform_3, window_bounds = array<i64: 32, 1>}, {transform_indices = @transform_4, window_bounds = array<i64: 1>}, {transform_indices = @transform_5, window_bounds = array<i64: 8, 1>}]} {
    %c0 = arith.constant 0 : index
    %c0_0 = arith.constant 0 : index
    %0 = vector.load %arg1[%c0, %c0_0] : memref<8x32xf32, #tpu.memory_space<vmem>>, vector<8x32xf32>
    %c0_1 = arith.constant 0 : index
    %c0_2 = arith.constant 0 : index
    %1 = vector.load %arg2[%c0_1, %c0_2] : memref<32x32xf32, #tpu.memory_space<vmem>>, vector<32x32xf32>
    %cst = arith.constant dense<0.000000e+00> : vector<8x32xf32>
    %2 = tpu.matmul %0, %1, %cst {dimension_numbers = #tpu.dot_dimension_numbers<[1], [0], [0], [1], [0, 0, 1, 1], [], []>} : vector<8x32xf32>, vector<32x32xf32>, vector<8x32xf32> -> vector<8x32xf32>
    %c0_3 = arith.constant 0 : index
    %c0_4 = arith.constant 0 : index
    %3 = vector.load %arg3[%c0_3, %c0_4] : memref<1x32xf32, #tpu.memory_space<vmem>>, vector<1x32xf32>
    %4 = vector.broadcast %3 : vector<1x32xf32> to vector<8x32xf32>
    %5 = arith.addf %2, %4 : vector<8x32xf32>
    %cst_5 = arith.constant 0.000000e+00 : f32
    %6 = vector.broadcast %cst_5 : f32 to vector<8x32xf32>
    %7 = arith.maximumf %5, %6 : vector<8x32xf32>
    %c0_6 = arith.constant 0 : index
    %c0_7 = arith.constant 0 : index
    %8 = vector.load %arg4[%c0_6, %c0_7] : memref<32x1xf32, #tpu.memory_space<vmem>>, vector<32x1xf32>
    %cst_8 = arith.constant dense<0.000000e+00> : vector<8x1xf32>
    %9 = tpu.matmul %7, %8, %cst_8 {dimension_numbers = #tpu.dot_dimension_numbers<[1], [0], [0], [1], [0, 0, 1, 1], [], []>} : vector<8x32xf32>, vector<32x1xf32>, vector<8x1xf32> -> vector<8x1xf32>
    %c0_9 = arith.constant 0 : index
    %10 = memref.load %arg5[%c0_9] : memref<1xf32, #tpu.memory_space<smem>>
    %11 = vector.broadcast %10 : f32 to vector<8x1xf32>
    %12 = arith.addf %9, %11 : vector<8x1xf32>
    %cst_10 = arith.constant 0.000000e+00 : f32
    %13 = vector.broadcast %cst_10 : f32 to vector<8x1xf32>
    %14 = arith.maximumf %12, %13 : vector<8x1xf32>
    %15 = math.absf %12 : vector<8x1xf32>
    %cst_11 = arith.constant 0.000000e+00 : f32
    %16 = vector.broadcast %cst_11 : f32 to vector<8x1xf32>
    %17 = arith.subf %16, %15 : vector<8x1xf32>
    %18 = math.exp %17 : vector<8x1xf32>
    %19 = math.log1p %18 : vector<8x1xf32>
    %20 = arith.addf %14, %19 : vector<8x1xf32>
    %c0_12 = arith.constant 0 : index
    %c0_13 = arith.constant 0 : index
    %21 = vector.load %arg6[%c0_12, %c0_13] : memref<8x1xf32, #tpu.memory_space<vmem>>, vector<8x1xf32>
    tpu.vector_store %arg6[%c0_12, %c0_13], %20 {strides = array<i32>} : memref<8x1xf32, #tpu.memory_space<vmem>>, vector<8x1xf32>,
    return
  }
  func.func @transform_0(%arg0: i32) -> (i32, i32) {
    %c0_i32 = arith.constant 0 : i32
    %c0_i32_0 = arith.constant 0 : i32
    return %arg0, %c0_i32 : i32, i32
  }
  func.func @transform_1(%arg0: i32) -> (i32, i32) {
    %c0_i32 = arith.constant 0 : i32
    %c0_i32_0 = arith.constant 0 : i32
    %c0_i32_1 = arith.constant 0 : i32
    return %c0_i32, %c0_i32_0 : i32, i32
  }
  func.func @transform_2(%arg0: i32) -> (i32, i32) {
    %c0_i32 = arith.constant 0 : i32
    %c0_i32_0 = arith.constant 0 : i32
    %c0_i32_1 = arith.constant 0 : i32
    return %c0_i32, %c0_i32_0 : i32, i32
  }
  func.func @transform_3(%arg0: i32) -> (i32, i32) {
    %c0_i32 = arith.constant 0 : i32
    %c0_i32_0 = arith.constant 0 : i32
    %c0_i32_1 = arith.constant 0 : i32
    return %c0_i32, %c0_i32_0 : i32, i32
  }
  func.func @transform_4(%arg0: i32) -> i32 {
    %c0_i32 = arith.constant 0 : i32
    %c0_i32_0 = arith.constant 0 : i32
    return %c0_i32 : i32
  }
  func.func @transform_5(%arg0: i32) -> (i32, i32) {
    %c0_i32 = arith.constant 0 : i32
    %c0_i32_0 = arith.constant 0 : i32
    return %arg0, %c0_i32 : i32, i32
  }
}

module attributes {stable_mosaic.version = 11 : i64} {
  func.func @_mlp_kernel(%arg0: i32, %arg1: memref<8x32xf32, #tpu.memory_space<vmem>>, %arg2: memref<32x32xf32, #tpu.memory_space<vmem>>, %arg3: memref<1x32xf32, #tpu.memory_space<vmem>>, %arg4: memref<32x1xf32, #tpu.memory_space<vmem>>, %arg5: memref<1xf32, #tpu.memory_space<smem>>, %arg6: memref<8x1xf32, #tpu.memory_space<vmem>>) attributes {dimension_semantics = [#tpu.dimension_semantics<parallel>], iteration_bounds = array<i64: 1>, scalar_prefetch = 0 : i64, scratch_operands = 0 : i64, tpu.core_type = #tpu.core_type<tc>, window_params = [{transform_indices = @transform_0, window_bounds = array<i64: 8, 32>}, {pipeline_mode = #tpu.pipeline_mode<synchronous>, transform_indices = @transform_1, window_bounds = array<i64: 32, 32>}, {pipeline_mode = #tpu.pipeline_mode<synchronous>, transform_indices = @transform_2, window_bounds = array<i64: 1, 32>}, {pipeline_mode = #tpu.pipeline_mode<synchronous>, transform_indices = @transform_3, window_bounds = array<i64: 32, 1>}, {transform_indices = @transform_4, window_bounds = array<i64: 1>}, {transform_indices = @transform_5, window_bounds = array<i64: 8, 1>}]} {
    %c0 = arith.constant 0 : index
    %c0_0 = arith.constant 0 : index
    %0 = vector.load %arg1[%c0, %c0_0] : memref<8x32xf32, #tpu.memory_space<vmem>>, vector<8x32xf32>
    %c0_1 = arith.constant 0 : index
    %c0_2 = arith.constant 0 : index
    %1 = vector.load %arg2[%c0_1, %c0_2] : memref<32x32xf32, #tpu.memory_space<vmem>>, vector<32x32xf32>
    %cst = arith.constant dense<0.000000e+00> : vector<8x32xf32>
    %2 = tpu.matmul %0, %1, %cst {dimension_numbers = #tpu.dot_dimension_numbers<[1], [0], [0], [1], [0, 0, 1, 1], [], []>} : vector<8x32xf32>, vector<32x32xf32>, vector<8x32xf32> -> vector<8x32xf32>
    %c0_3 = arith.constant 0 : index
    %c0_4 = arith.constant 0 : index
    %3 = vector.load %arg3[%c0_3, %c0_4] : memref<1x32xf32, #tpu.memory_space<vmem>>, vector<1x32xf32>
    %4 = vector.broadcast %3 : vector<1x32xf32> to vector<8x32xf32>
    %5 = arith.addf %2, %4 : vector<8x32xf32>
    %cst_5 = arith.constant 0.000000e+00 : f32
    %6 = vector.broadcast %cst_5 : f32 to vector<8x32xf32>
    %7 = arith.maximumf %5, %6 : vector<8x32xf32>
    %c0_6 = arith.constant 0 : index
    %c0_7 = arith.constant 0 : index
    %8 = vector.load %arg4[%c0_6, %c0_7] : memref<32x1xf32, #tpu.memory_space<vmem>>, vector<32x1xf32>
    %cst_8 = arith.constant dense<0.000000e+00> : vector<8x1xf32>
    %9 = tpu.matmul %7, %8, %cst_8 {dimension_numbers = #tpu.dot_dimension_numbers<[1], [0], [0], [1], [0, 0, 1, 1], [], []>} : vector<8x32xf32>, vector<32x1xf32>, vector<8x1xf32> -> vector<8x1xf32>
    %c0_9 = arith.constant 0 : index
    %10 = memref.load %arg5[%c0_9] : memref<1xf32, #tpu.memory_space<smem>>
    %11 = vector.broadcast %10 : f32 to vector<8x1xf32>
    %12 = arith.addf %9, %11 : vector<8x1xf32>
    %cst_10 = arith.constant 0.000000e+00 : f32
    %13 = vector.broadcast %cst_10 : f32 to vector<8x1xf32>
    %14 = arith.maximumf %12, %13 : vector<8x1xf32>
    %15 = math.absf %12 : vector<8x1xf32>
    %cst_11 = arith.constant 0.000000e+00 : f32
    %16 = vector.broadcast %cst_11 : f32 to vector<8x1xf32>
    %17 = arith.subf %16, %15 : vector<8x1xf32>
    %18 = math.exp %17 : vector<8x1xf32>
    %19 = math.log1p %18 : vector<8x1xf32>
    %20 = arith.addf %14, %19 : vector<8x1xf32>
    %c0_12 = arith.constant 0 : index
    %c0_13 = arith.constant 0 : index
    %21 = vector.load %arg6[%c0_12, %c0_13] : memref<8x1xf32, #tpu.memory_space<vmem>>, vector<8x1xf32>
    tpu.vector_store %arg6[%c0_12, %c0_13], %20 {strides = array<i32>} : memref<8x1xf32, #tpu.memory_space<vmem>>, vector<8x1xf32>,
    return
  }
  func.func @transform_0(%arg0: i32) -> (i32, i32) {
    %c0_i32 = arith.constant 0 : i32
    %c0_i32_0 = arith.constant 0 : i32
    return %arg0, %c0_i32 : i32, i32
  }
  func.func @transform_1(%arg0: i32) -> (i32, i32) {
    %c0_i32 = arith.constant 0 : i32
    %c0_i32_0 = arith.constant 0 : i32
    %c0_i32_1 = arith.constant 0 : i32
    return %c0_i32, %c0_i32_0 : i32, i32
  }
  func.func @transform_2(%arg0: i32) -> (i32, i32) {
    %c0_i32 = arith.constant 0 : i32
    %c0_i32_0 = arith.constant 0 : i32
    %c0_i32_1 = arith.constant 0 : i32
    return %c0_i32, %c0_i32_0 : i32, i32
  }
  func.func @transform_3(%arg0: i32) -> (i32, i32) {
    %c0_i32 = arith.constant 0 : i32
    %c0_i32_0 = arith.constant 0 : i32
    %c0_i32_1 = arith.constant 0 : i32
    return %c0_i32, %c0_i32_0 : i32, i32
  }
  func.func @transform_4(%arg0: i32) -> i32 {
    %c0_i32 = arith.constant 0 : i32
    %c0_i32_0 = arith.constant 0 : i32
    return %c0_i32 : i32
  }
  func.func @transform_5(%arg0: i32) -> (i32, i32) {
    %c0_i32 = arith.constant 0 : i32
    %c0_i32_0 = arith.constant 0 : i32
    return %arg0, %c0_i32 : i32, i32
  }
}

</mosaic_0001>

<llo_original>
// kernel: tpu_custom_call.1
$region0: #{tpu_custom_call.1}
  #allocation0 [shape = 'u32[]', space=smem, size = 0x4, offset = 0x4, fixed_abs, tag = 'smem constant byte address 0x4 - core index']
  #allocation1 [shape = 'u32[144,128]{1,0:T(1,128)}', space=vmem, size = 0x12000, scoped, tag = 'internal scratch']
  #allocation2 [shape = 'f32[1]{0:T(128)S(6)}', space=smem, size = 0x200, scoped, tag = 'scoped memory for tpu_custom_call.1']
  %s0 = inlined_call_operand.vmem [shape: f32[8,32], index: 0, kind: input, shape index: {}]
  %s1 = inlined_call_operand.vmem [shape: f32[32,32], index: 1, kind: input, shape index: {}]
  %s2 = inlined_call_operand.vmem [shape: f32[1,32], index: 2, kind: input, shape index: {}]
  %s3 = inlined_call_operand.vmem [shape: f32[32,1], index: 3, kind: input, shape index: {}]
  %s4 = inlined_call_operand.<no memory space> [shape: f32[1], index: 4, kind: input, shape index: {}]
  %s5 = inlined_call_operand.vmem [shape: f32[8,1], index: 5, kind: output, shape index: {}]
  %s6 = sld [smem:[#allocation0]]
  $region30: #{tpu_custom_call.1} parent=0
    _
  %s8 = ssub.s32 1, %s6
  %s9 = scalar_select 0, %s8, %s6
  %10 = sst [smem:[#allocation2]] %s4
  // Predicated region
  $region2: #{tpu_custom_call.1} parent=0 // pred_check
    _
  $region3: #{tpu_custom_call.1} parent=0 // pred_check_branch
    %12 = sbr.rel (0) target = $region5
  $region4: #{tpu_custom_call.1} parent=0 // pred_region
    _
  $region5: #{tpu_custom_call.1} parent=0 // pred_fallthru
    _
  // Predicated region
  $region6: #{tpu_custom_call.1} parent=0 // pred_check
    _
  $region7: #{tpu_custom_call.1} parent=0 // pred_check_branch
    %14 = sbr.rel (0) target = $region9
  $region8: #{tpu_custom_call.1} parent=0 // pred_region
    _
  $region9: #{tpu_custom_call.1} parent=0 // pred_fallthru
    _
  // Predicated region
  $region10: #{tpu_custom_call.1} parent=0 // pred_check
    _
  $region11: #{tpu_custom_call.1} parent=0 // pred_check_branch
    %16 = sbr.rel (0) target = $region13
  $region12: #{tpu_custom_call.1} parent=0 // pred_region
    _
  $region13: #{tpu_custom_call.1} parent=0 // pred_fallthru
    _
  // Predicated region
  $region14: #{tpu_custom_call.1} parent=0 // pred_check
    _
  $region15: #{tpu_custom_call.1} parent=0 // pred_check_branch
    %18 = sbr.rel (0) target = $region17
  $region16: #{tpu_custom_call.1} parent=0 // pred_region
    _
  $region17: #{tpu_custom_call.1} parent=0 // pred_fallthru
    _
  // Predicated region
  $region18: #{tpu_custom_call.1} parent=0 // pred_check
    _
  $region19: #{tpu_custom_call.1} parent=0 // pred_check_branch
    %20 = sbr.rel (0) target = $region21
  $region20: #{tpu_custom_call.1} parent=0 // pred_region
    _
  $region21: #{tpu_custom_call.1} parent=0 // pred_fallthru
    _
  %v21 = vld [vmem:[%s0] sm:$0xff]
  %v22 = vld [vmem:[%s1] sm:$0xff]
  %v23 = vld [vmem:[%s1 + $0x8] sm:$0xff]
  %v24 = vld [vmem:[%s1 + $0x10] sm:$0xff]
  %v25 = vld [vmem:[%s1 + $0x18] sm:$0xff]
  %v26 = vld [vmem:[%s2] sm:$0x1]
  %v28 = vlaneseq
  %v29 = vshrl.u32 %v28, 7
  %v30 = vsub.s32 0, %v29
  %v31 = vrot.slane %v26, %v30
  %vm33 = vcmask 261120
  %v35 = vsel %vm33, %v21, 0
  %37 = vmatprep.subr.mxu0 0.0
  %38 = vmatpush1.msra.mxu0 %v22
  %39 = vmatprep.subr.mxu0 0.0
  %40 = vmatpush1.msra.mxu0 %v23
  %41 = vmatprep.subr.mxu0 0.0
  %42 = vmatpush1.msra.mxu0 %v24
  %43 = vmatprep.subr.mxu0 0.0
  %44 = vmatpush1.msra.mxu0 %v25
  %45 = vmatprep.subr.mxu0 0.0
  %46 = vmatpush1.msra.mxu0 0.0
  %47 = vmatprep.subr.mxu0 0.0
  %48 = vmatpush1.msra.mxu0 0.0
  %49 = vmatprep.subr.mxu0 0.0
  %50 = vmatpush1.msra.mxu0 0.0
  %51 = vmatprep.subr.mxu0 0.0
  %52 = vmatpush1.msra.mxu0 0.0
  %53 = vmatprep.subr.mxu0 0.0
  %54 = vmatpush1.msra.mxu0 0.0
  %55 = vmatprep.subr.mxu0 0.0
  %56 = vmatpush1.msra.mxu0 0.0
  %57 = vmatprep.subr.mxu0 0.0
  %58 = vmatpush1.msra.mxu0 0.0
  %59 = vmatprep.subr.mxu0 0.0
  %60 = vmatpush1.msra.mxu0 0.0
  %61 = vmatprep.subr.mxu0 0.0
  %62 = vmatpush1.msra.mxu0 0.0
  %63 = vmatprep.subr.mxu0 0.0
  %64 = vmatpush1.msra.mxu0 0.0
  %65 = vmatprep.subr.mxu0 0.0
  %66 = vmatpush1.msra.mxu0 0.0
  %67 = vmatprep.subr.mxu0 0.0
  %68 = vmatpush1.msra.mxu0 0.0
  %69 = vmatprep.subr.mxu0 0.0
  %70 = vmatpush1.msra.mxu0 0.0
  %71 = vmatprep.subr.mxu0 0.0
  %72 = vmatpush1.msra.mxu0 0.0
  %73 = vmatprep.subr.mxu0 0.0
  %74 = vmatpush1.msra.mxu0 0.0
  %75 = vmatprep.subr.mxu0 0.0
  %76 = vmatpush1.msra.mxu0 0.0
  %77 = vmatprep.subr.mxu0 0.0
  %78 = vmatpush1.msra.mxu0 0.0
  %79 = vmatprep.subr.mxu0 0.0
  %80 = vmatpush1.msra.mxu0 0.0
  %81 = vmatprep.subr.mxu0 0.0
  %82 = vmatpush1.msra.mxu0 0.0
  %83 = vmatprep.subr.mxu0 0.0
  %84 = vmatpush1.msra.mxu0 0.0
  %85 = vmatprep.subr.mxu0 0.0
  %86 = vmatpush1.msra.mxu0 0.0
  %87 = vmatprep.subr.mxu0 0.0
  %88 = vmatpush1.msra.mxu0 0.0
  %89 = vmatprep.subr.mxu0 0.0
  %90 = vmatpush1.msra.mxu0 0.0
  %91 = vmatprep.subr.mxu0 0.0
  %92 = vmatpush1.msra.mxu0 0.0
  %93 = vmatprep.subr.mxu0 0.0
  %94 = vmatpush1.msra.mxu0 0.0
  %95 = vmatprep.subr.mxu0 0.0
  %96 = vmatpush1.msra.mxu0 0.0
  %97 = vmatprep.subr.mxu0 0.0
  %98 = vmatpush1.msra.mxu0 0.0
  %99 = vmatprep.subr.mxu0 0.0
  %100 = vmatpush1.msra.mxu0 0.0
  %101 = vmatprep.mubr.f32.mxu0 0.0
  %102 = vmatmul.mubr.f32.gmra.mrb[0].mxu0 %v35
  %v103 = vpop.f32.mrb[0].mxu0
  %v104 = vadd.f32 %v31, %v103
  %v105 = vpop.f32.mrb[0].mxu0
  %106 = vdwg.mxu0
  %v107 = vmax.f32 %v104, 0.0
  %v108 = vld [vmem:[%s3] sm:$0xff]
  %v109 = vld [vmem:[%s3 + $0x8] sm:$0xff]
  %v110 = vld [vmem:[%s3 + $0x10] sm:$0xff]
  %v111 = vld [vmem:[%s3 + $0x18] sm:$0xff]
  %s112 = sld [smem:[#allocation2]]
  %v113 = vstv %s112
  %v115 = vsel %vm33, %v107, 0
  %117 = vmatprep.subr.mxu0 0.0
  %118 = vmatpush1.msra.mxu0 %v108
  %119 = vmatprep.subr.mxu0 0.0
  %120 = vmatpush1.msra.mxu0 %v109
  %121 = vmatprep.subr.mxu0 0.0
  %122 = vmatpush1.msra.mxu0 %v110
  %123 = vmatprep.subr.mxu0 0.0
  %124 = vmatpush1.msra.mxu0 %v111
  %125 = vmatprep.subr.mxu0 0.0
  %126 = vmatpush1.msra.mxu0 0.0
  %127 = vmatprep.subr.mxu0 0.0
  %128 = vmatpush1.msra.mxu0 0.0
  %129 = vmatprep.subr.mxu0 0.0
  %130 = vmatpush1.msra.mxu0 0.0
  %131 = vmatprep.subr.mxu0 0.0
  %132 = vmatpush1.msra.mxu0 0.0
  %133 = vmatprep.subr.mxu0 0.0
  %134 = vmatpush1.msra.mxu0 0.0
  %135 = vmatprep.subr.mxu0 0.0
  %136 = vmatpush1.msra.mxu0 0.0
  %137 = vmatprep.subr.mxu0 0.0
  %138 = vmatpush1.msra.mxu0 0.0
  %139 = vmatprep.subr.mxu0 0.0
  %140 = vmatpush1.msra.mxu0 0.0
  %141 = vmatprep.subr.mxu0 0.0
  %142 = vmatpush1.msra.mxu0 0.0
  %143 = vmatprep.subr.mxu0 0.0
  %144 = vmatpush1.msra.mxu0 0.0
  %145 = vmatprep.subr.mxu0 0.0
  %146 = vmatpush1.msra.mxu0 0.0
  %147 = vmatprep.subr.mxu0 0.0
  %148 = vmatpush1.msra.mxu0 0.0
  %149 = vmatprep.subr.mxu0 0.0
  %150 = vmatpush1.msra.mxu0 0.0
  %151 = vmatprep.subr.mxu0 0.0
  %152 = vmatpush1.msra.mxu0 0.0
  %153 = vmatprep.subr.mxu0 0.0
  %154 = vmatpush1.msra.mxu0 0.0
  %155 = vmatprep.subr.mxu0 0.0
  %156 = vmatpush1.msra.mxu0 0.0
  %157 = vmatprep.subr.mxu0 0.0
  %158 = vmatpush1.msra.mxu0 0.0
  %159 = vmatprep.subr.mxu0 0.0
  %160 = vmatpush1.msra.mxu0 0.0
  %161 = vmatprep.subr.mxu0 0.0
  %162 = vmatpush1.msra.mxu0 0.0
  %163 = vmatprep.subr.mxu0 0.0
  %164 = vmatpush1.msra.mxu0 0.0
  %165 = vmatprep.subr.mxu0 0.0
  %166 = vmatpush1.msra.mxu0 0.0
  %167 = vmatprep.subr.mxu0 0.0
  %168 = vmatpush1.msra.mxu0 0.0
  %169 = vmatprep.subr.mxu0 0.0
  %170 = vmatpush1.msra.mxu0 0.0
  %171 = vmatprep.subr.mxu0 0.0
  %172 = vmatpush1.msra.mxu0 0.0
  %173 = vmatprep.subr.mxu0 0.0
  %174 = vmatpush1.msra.mxu0 0.0
  %175 = vmatprep.subr.mxu0 0.0
  %176 = vmatpush1.msra.mxu0 0.0
  %177 = vmatprep.subr.mxu0 0.0
  %178 = vmatpush1.msra.mxu0 0.0
  %179 = vmatprep.subr.mxu0 0.0
  %180 = vmatpush1.msra.mxu0 0.0
  %181 = vmatprep.mubr.f32.mxu0 0.0
  %182 = vmatmul.mubr.f32.gmra.mrb[0].mxu0 %v115
  %v183 = vpop.f32.mrb[0].mxu0
  %v184 = vadd.f32 %v113, %v183
  %v185 = vpop.f32.mrb[0].mxu0
  %186 = vdwg.mxu0
  %v187 = vmax.f32 %v184, 0.0
  %v188 = vand.u32 2147483647, %v184
  %v189 = vsub.f32 0.0, %v188
  %v190 = vmul.f32 %v189, 1.442695
  %v191 = vpow.pop %v190
  %v192 = vadd.f32 %v191, 1.0
  %v193 = vlog2.pop %v192
  %v194 = vmul.f32 %v193, 0.6931472
  %v195 = vmul.f32 -0.5, %v191
  %v196 = vadd.f32 %v195, 1.0
  %v197 = vmul.f32 %v196, %v191
  %v198 = vand.u32 2147483647, %v191
  %vm199 = vcmp.lt.f32.partialorder %v198, 0.0004427343
  %v200 = vsel %vm199, %v197, %v194
  %v201 = vadd.f32 %v187, %v200
  %vm202 = vcmask 7168
  %203 = vst.msk [vmem:[%s5] sm:$0xff] %vm202, %v201
  // Predicated region
  $region22: #{tpu_custom_call.1} parent=0 // pred_check
    _
  $region23: #{tpu_custom_call.1} parent=0 // pred_check_branch
    %205 = sbr.rel (0) target = $region25
  $region24: #{tpu_custom_call.1} parent=0 // pred_region
    _
  $region25: #{tpu_custom_call.1} parent=0 // pred_fallthru
    _
  // Predicated region
  $region26: #{tpu_custom_call.1} parent=0 // pred_check
    _
  $region27: #{tpu_custom_call.1} parent=0 // pred_check_branch
    %207 = sbr.rel (0) target = $region29
  $region28: #{tpu_custom_call.1} parent=0 // pred_region
    _
  $region29: #{tpu_custom_call.1} parent=0 // pred_fallthru
    _

// kernel: tpu_custom_call.1
$region0: #{tpu_custom_call.1}
  #allocation0 [shape = 'u32[]', space=smem, size = 0x4, offset = 0x4, fixed_abs, tag = 'smem constant byte address 0x4 - core index']
  #allocation1 [shape = 'u32[144,128]{1,0:T(1,128)}', space=vmem, size = 0x12000, scoped, tag = 'internal scratch']
  #allocation2 [shape = 'f32[1]{0:T(128)S(6)}', space=smem, size = 0x200, scoped, tag = 'scoped memory for tpu_custom_call.1']
  %s0 = inlined_call_operand.vmem [shape: f32[8,32], index: 0, kind: input, shape index: {}]
  %s1 = inlined_call_operand.vmem [shape: f32[32,32], index: 1, kind: input, shape index: {}]
  %s2 = inlined_call_operand.vmem [shape: f32[1,32], index: 2, kind: input, shape index: {}]
  %s3 = inlined_call_operand.vmem [shape: f32[32,1], index: 3, kind: input, shape index: {}]
  %s4 = inlined_call_operand.<no memory space> [shape: f32[1], index: 4, kind: input, shape index: {}]
  %s5 = inlined_call_operand.vmem [shape: f32[8,1], index: 5, kind: output, shape index: {}]
  %s6 = sld [smem:[#allocation0]]
  $region30: #{tpu_custom_call.1} parent=0
    _
  %s8 = ssub.s32 1, %s6
  %s9 = scalar_select 0, %s8, %s6
  %10 = sst [smem:[#allocation2]] %s4
  // Predicated region
  $region2: #{tpu_custom_call.1} parent=0 // pred_check
    _
  $region3: #{tpu_custom_call.1} parent=0 // pred_check_branch
    %12 = sbr.rel (0) target = $region5
  $region4: #{tpu_custom_call.1} parent=0 // pred_region
    _
  $region5: #{tpu_custom_call.1} parent=0 // pred_fallthru
    _
  // Predicated region
  $region6: #{tpu_custom_call.1} parent=0 // pred_check
    _
  $region7: #{tpu_custom_call.1} parent=0 // pred_check_branch
    %14 = sbr.rel (0) target = $region9
  $region8: #{tpu_custom_call.1} parent=0 // pred_region
    _
  $region9: #{tpu_custom_call.1} parent=0 // pred_fallthru
    _
  // Predicated region
  $region10: #{tpu_custom_call.1} parent=0 // pred_check
    _
  $region11: #{tpu_custom_call.1} parent=0 // pred_check_branch
    %16 = sbr.rel (0) target = $region13
  $region12: #{tpu_custom_call.1} parent=0 // pred_region
    _
  $region13: #{tpu_custom_call.1} parent=0 // pred_fallthru
    _
  // Predicated region
  $region14: #{tpu_custom_call.1} parent=0 // pred_check
    _
  $region15: #{tpu_custom_call.1} parent=0 // pred_check_branch
    %18 = sbr.rel (0) target = $region17
  $region16: #{tpu_custom_call.1} parent=0 // pred_region
    _
  $region17: #{tpu_custom_call.1} parent=0 // pred_fallthru
    _
  // Predicated region
  $region18: #{tpu_custom_call.1} parent=0 // pred_check
    _
  $region19: #{tpu_custom_call.1} parent=0 // pred_check_branch
    %20 = sbr.rel (0) target = $region21
  $region20: #{tpu_custom_call.1} parent=0 // pred_region
    _
  $region21: #{tpu_custom_call.1} parent=0 // pred_fallthru
    _
  %v21 = vld [vmem:[%s0] sm:$0xff]
  %v22 = vld [vmem:[%s1] sm:$0xff]
  %v23 = vld [vmem:[%s1 + $0x8] sm:$0xff]
  %v24 = vld [vmem:[%s1 + $0x10] sm:$0xff]
  %v25 = vld [vmem:[%s1 + $0x18] sm:$0xff]
  %v26 = vld [vmem:[%s2] sm:$0x1]
  %v28 = vlaneseq
  %v29 = vshrl.u32 %v28, 7
  %v30 = vsub.s32 0, %v29
  %v31 = vrot.slane %v26, %v30
  %vm33 = vcmask 261120
  %v35 = vsel %vm33, %v21, 0
  %37 = vmatprep.subr.mxu0 0.0
  %38 = vmatpush1.msra.mxu0 %v22
  %39 = vmatprep.subr.mxu0 0.0
  %40 = vmatpush1.msra.mxu0 %v23
  %41 = vmatprep.subr.mxu0 0.0
  %42 = vmatpush1.msra.mxu0 %v24
  %43 = vmatprep.subr.mxu0 0.0
  %44 = vmatpush1.msra.mxu0 %v25
  %45 = vmatprep.subr.mxu0 0.0
  %46 = vmatpush1.msra.mxu0 0.0
  %47 = vmatprep.subr.mxu0 0.0
  %48 = vmatpush1.msra.mxu0 0.0
  %49 = vmatprep.subr.mxu0 0.0
  %50 = vmatpush1.msra.mxu0 0.0
  %51 = vmatprep.subr.mxu0 0.0
  %52 = vmatpush1.msra.mxu0 0.0
  %53 = vmatprep.subr.mxu0 0.0
  %54 = vmatpush1.msra.mxu0 0.0
  %55 = vmatprep.subr.mxu0 0.0
  %56 = vmatpush1.msra.mxu0 0.0
  %57 = vmatprep.subr.mxu0 0.0
  %58 = vmatpush1.msra.mxu0 0.0
  %59 = vmatprep.subr.mxu0 0.0
  %60 = vmatpush1.msra.mxu0 0.0
  %61 = vmatprep.subr.mxu0 0.0
  %62 = vmatpush1.msra.mxu0 0.0
  %63 = vmatprep.subr.mxu0 0.0
  %64 = vmatpush1.msra.mxu0 0.0
  %65 = vmatprep.subr.mxu0 0.0
  %66 = vmatpush1.msra.mxu0 0.0
  %67 = vmatprep.subr.mxu0 0.0
  %68 = vmatpush1.msra.mxu0 0.0
  %69 = vmatprep.subr.mxu0 0.0
  %70 = vmatpush1.msra.mxu0 0.0
  %71 = vmatprep.subr.mxu0 0.0
  %72 = vmatpush1.msra.mxu0 0.0
  %73 = vmatprep.subr.mxu0 0.0
  %74 = vmatpush1.msra.mxu0 0.0
  %75 = vmatprep.subr.mxu0 0.0
  %76 = vmatpush1.msra.mxu0 0.0
  %77 = vmatprep.subr.mxu0 0.0
  %78 = vmatpush1.msra.mxu0 0.0
  %79 = vmatprep.subr.mxu0 0.0
  %80 = vmatpush1.msra.mxu0 0.0
  %81 = vmatprep.subr.mxu0 0.0
  %82 = vmatpush1.msra.mxu0 0.0
  %83 = vmatprep.subr.mxu0 0.0
  %84 = vmatpush1.msra.mxu0 0.0
  %85 = vmatprep.subr.mxu0 0.0
  %86 = vmatpush1.msra.mxu0 0.0
  %87 = vmatprep.subr.mxu0 0.0
  %88 = vmatpush1.msra.mxu0 0.0
  %89 = vmatprep.subr.mxu0 0.0
  %90 = vmatpush1.msra.mxu0 0.0
  %91 = vmatprep.subr.mxu0 0.0
  %92 = vmatpush1.msra.mxu0 0.0
  %93 = vmatprep.subr.mxu0 0.0
  %94 = vmatpush1.msra.mxu0 0.0
  %95 = vmatprep.subr.mxu0 0.0
  %96 = vmatpush1.msra.mxu0 0.0
  %97 = vmatprep.subr.mxu0 0.0
  %98 = vmatpush1.msra.mxu0 0.0
  %99 = vmatprep.subr.mxu0 0.0
  %100 = vmatpush1.msra.mxu0 0.0
  %101 = vmatprep.mubr.f32.mxu0 0.0
  %102 = vmatmul.mubr.f32.gmra.mrb[0].mxu0 %v35
  %v103 = vpop.f32.mrb[0].mxu0
  %v104 = vadd.f32 %v31, %v103
  %v105 = vpop.f32.mrb[0].mxu0
  %106 = vdwg.mxu0
  %v107 = vmax.f32 %v104, 0.0
  %v108 = vld [vmem:[%s3] sm:$0xff]
  %v109 = vld [vmem:[%s3 + $0x8] sm:$0xff]
  %v110 = vld [vmem:[%s3 + $0x10] sm:$0xff]
  %v111 = vld [vmem:[%s3 + $0x18] sm:$0xff]
  %s112 = sld [smem:[#allocation2]]
  %v113 = vstv %s112
  %v115 = vsel %vm33, %v107, 0
  %117 = vmatprep.subr.mxu0 0.0
  %118 = vmatpush1.msra.mxu0 %v108
  %119 = vmatprep.subr.mxu0 0.0
  %120 = vmatpush1.msra.mxu0 %v109
  %121 = vmatprep.subr.mxu0 0.0
  %122 = vmatpush1.msra.mxu0 %v110
  %123 = vmatprep.subr.mxu0 0.0
  %124 = vmatpush1.msra.mxu0 %v111
  %125 = vmatprep.subr.mxu0 0.0
  %126 = vmatpush1.msra.mxu0 0.0
  %127 = vmatprep.subr.mxu0 0.0
  %128 = vmatpush1.msra.mxu0 0.0
  %129 = vmatprep.subr.mxu0 0.0
  %130 = vmatpush1.msra.mxu0 0.0
  %131 = vmatprep.subr.mxu0 0.0
  %132 = vmatpush1.msra.mxu0 0.0
  %133 = vmatprep.subr.mxu0 0.0
  %134 = vmatpush1.msra.mxu0 0.0
  %135 = vmatprep.subr.mxu0 0.0
  %136 = vmatpush1.msra.mxu0 0.0
  %137 = vmatprep.subr.mxu0 0.0
  %138 = vmatpush1.msra.mxu0 0.0
  %139 = vmatprep.subr.mxu0 0.0
  %140 = vmatpush1.msra.mxu0 0.0
  %141 = vmatprep.subr.mxu0 0.0
  %142 = vmatpush1.msra.mxu0 0.0
  %143 = vmatprep.subr.mxu0 0.0
  %144 = vmatpush1.msra.mxu0 0.0
  %145 = vmatprep.subr.mxu0 0.0
  %146 = vmatpush1.msra.mxu0 0.0
  %147 = vmatprep.subr.mxu0 0.0
  %148 = vmatpush1.msra.mxu0 0.0
  %149 = vmatprep.subr.mxu0 0.0
  %150 = vmatpush1.msra.mxu0 0.0
  %151 = vmatprep.subr.mxu0 0.0
  %152 = vmatpush1.msra.mxu0 0.0
  %153 = vmatprep.subr.mxu0 0.0
  %154 = vmatpush1.msra.mxu0 0.0
  %155 = vmatprep.subr.mxu0 0.0
  %156 = vmatpush1.msra.mxu0 0.0
  %157 = vmatprep.subr.mxu0 0.0
  %158 = vmatpush1.msra.mxu0 0.0
  %159 = vmatprep.subr.mxu0 0.0
  %160 = vmatpush1.msra.mxu0 0.0
  %161 = vmatprep.subr.mxu0 0.0
  %162 = vmatpush1.msra.mxu0 0.0
  %163 = vmatprep.subr.mxu0 0.0
  %164 = vmatpush1.msra.mxu0 0.0
  %165 = vmatprep.subr.mxu0 0.0
  %166 = vmatpush1.msra.mxu0 0.0
  %167 = vmatprep.subr.mxu0 0.0
  %168 = vmatpush1.msra.mxu0 0.0
  %169 = vmatprep.subr.mxu0 0.0
  %170 = vmatpush1.msra.mxu0 0.0
  %171 = vmatprep.subr.mxu0 0.0
  %172 = vmatpush1.msra.mxu0 0.0
  %173 = vmatprep.subr.mxu0 0.0
  %174 = vmatpush1.msra.mxu0 0.0
  %175 = vmatprep.subr.mxu0 0.0
  %176 = vmatpush1.msra.mxu0 0.0
  %177 = vmatprep.subr.mxu0 0.0
  %178 = vmatpush1.msra.mxu0 0.0
  %179 = vmatprep.subr.mxu0 0.0
  %180 = vmatpush1.msra.mxu0 0.0
  %181 = vmatprep.mubr.f32.mxu0 0.0
  %182 = vmatmul.mubr.f32.gmra.mrb[0].mxu0 %v115
  %v183 = vpop.f32.mrb[0].mxu0
  %v184 = vadd.f32 %v113, %v183
  %v185 = vpop.f32.mrb[0].mxu0
  %186 = vdwg.mxu0
  %v187 = vmax.f32 %v184, 0.0
  %v188 = vand.u32 2147483647, %v184
  %v189 = vsub.f32 0.0, %v188
  %v190 = vmul.f32 %v189, 1.442695
  %v191 = vpow.pop %v190
  %v192 = vadd.f32 %v191, 1.0
  %v193 = vlog2.pop %v192
  %v194 = vmul.f32 %v193, 0.6931472
  %v195 = vmul.f32 -0.5, %v191
  %v196 = vadd.f32 %v195, 1.0
  %v197 = vmul.f32 %v196, %v191
  %v198 = vand.u32 2147483647, %v191
  %vm199 = vcmp.lt.f32.partialorder %v198, 0.0004427343
  %v200 = vsel %vm199, %v197, %v194
  %v201 = vadd.f32 %v187, %v200
  %vm202 = vcmask 7168
  %203 = vst.msk [vmem:[%s5] sm:$0xff] %vm202, %v201
  // Predicated region
  $region22: #{tpu_custom_call.1} parent=0 // pred_check
    _
  $region23: #{tpu_custom_call.1} parent=0 // pred_check_branch
    %205 = sbr.rel (0) target = $region25
  $region24: #{tpu_custom_call.1} parent=0 // pred_region
    _
  $region25: #{tpu_custom_call.1} parent=0 // pred_fallthru
    _
  // Predicated region
  $region26: #{tpu_custom_call.1} parent=0 // pred_check
    _
  $region27: #{tpu_custom_call.1} parent=0 // pred_check_branch
    %207 = sbr.rel (0) target = $region29
  $region28: #{tpu_custom_call.1} parent=0 // pred_region
    _
  $region29: #{tpu_custom_call.1} parent=0 // pred_fallthru
    _

</llo_original>
